<compile_context>
chip_gen: v6e
topology: v6e:2x2x1
jax: 0.10.0
libtpu: 0.0.40
codegen_flags: <defaults>
</compile_context>

<pallas_src>
import functools

import jax
import jax.numpy as jnp
from jax.experimental import pallas as pl
from jax.experimental.pallas import tpu as pltpu


# ----------------------------------------------------------------------------- kernel

def _acw_kernel(pred_ref, tgt_ref, s_ref, inter_ref, union_ref, cnt_ref,
                *, eps, ignore_index, hw, chunk, tiles_per_shard, approx_reciprocal):
    """One (C, T) slab of pixels for one (batch, shard); accumulates per-class partials.

    pred_ref : (C, T)  logits, native dtype (cast to f32 per chunk)
    tgt_ref  : (1, T)  integer labels, native dtype
    outputs  : (C, chunk) lane-dense accumulators (reduced over lanes in the glue)
    """
    s_id = pl.program_id(1)          # pixel-shard index (parallel)
    i_id = pl.program_id(2)          # pixel-tile index inside shard (reduction axis)

    C, T = pred_ref.shape
    n_chunks = T // chunk            # static
    ragged = (hw % T) != 0           # static

    cls = jax.lax.broadcasted_iota(jnp.int32, (C, 1), 0)   # (C, 1) tiny class iota

    if ragged:
        # first global pixel index of this tile (scalar)
        tile_base = (s_id * tiles_per_shard + i_id) * T

    def chunk_body(c, carry):
        s_acc, i_acc, u_acc, n_acc = carry
        off = pl.multiple_of(c * chunk, chunk)

        # in-kernel dtype casts: bf16 logits / narrow int labels stream at native width
        x = pred_ref[:, pl.ds(off, chunk)].astype(jnp.float32)      # (C, chunk)
        t = tgt_ref[:, pl.ds(off, chunk)].astype(jnp.int32)         # (1, chunk)

        if ragged:
            # out-of-range lanes become ignored pixels; logits zeroed to keep exp finite
            lane = jax.lax.broadcasted_iota(jnp.int32, (1, chunk), 1)
            valid = (tile_base + off + lane) < hw
            t = jnp.where(valid, t, ignore_index)
            x = jnp.where(valid, x, 0.0)

        # softmax over the class (sublane) axis: one reciprocal/divide per pixel
        m = jnp.max(x, axis=0, keepdims=True)
        e = jnp.exp(x - m)
        denom = jnp.sum(e, axis=0, keepdims=True)
        if approx_reciprocal:
            p = e * pl.reciprocal(denom, approx=True)               # EUP fast path
        else:
            p = e * (1.0 / denom)                                   # exact (per-pixel only)

        ignore = (t == ignore_index)                                # (1, chunk)
        is_tgt = jnp.logical_and(cls == t, jnp.logical_not(ignore)) # (C, chunk)
        one_hot = is_tgt.astype(jnp.float32)

        err = (one_hot - p) ** 2
        # log((1-err+eps)/(1+err+eps)) == log(1-err+eps) - log(1+err+eps): the per
        # class-pixel divide is eliminated exactly (no approx-reciprocal precision risk).
        pnc = err - jnp.log(1.0 - err + eps) + jnp.log(1.0 + err + eps)
        # acw = (1 + p + one_hot) * mfb[c]; mfb is applied per-class in the glue.
        w = jnp.where(ignore, 0.0, 1.0 + p + one_hot)

        return (s_acc + w * pnc,
                i_acc + jnp.where(is_tgt, p, 0.0),
                u_acc + jnp.where(ignore, 0.0, p + one_hot),
                n_acc + one_hot)

    zeros = jnp.zeros((C, chunk), jnp.float32)
    s_p, i_p, u_p, n_p = jax.lax.fori_loop(
        0, n_chunks, chunk_body, (zeros, zeros, zeros, zeros),
        unroll=min(8, n_chunks))

    @pl.when(i_id == 0)
    def _():
        s_ref[...] = jnp.zeros_like(s_ref)
        inter_ref[...] = jnp.zeros_like(inter_ref)
        union_ref[...] = jnp.zeros_like(union_ref)
        cnt_ref[...] = jnp.zeros_like(cnt_ref)

    # lane-dense (C, chunk) accumulation: plain VPU adds, unmasked stores
    s_ref[...] += s_p
    inter_ref[...] += i_p
    union_ref[...] += u_p
    cnt_ref[...] += n_p


# ----------------------------------------------------------------------------- wrapper

def acw_loss_pallas(prediction, target, *, eps=1e-5, ignore_index=255,
                    ini_weight=0.0, ini_iteration=0, tile=2048, chunk=256,
                    max_shards=2, approx_reciprocal=False):
    """prediction: (N, C, H, W) logits (any float dtype); target: (N, H, W) int labels."""
    N, C, H, W = prediction.shape
    hw = H * W
    P = N * hw

    # ---- lane tiling --------------------------------------------------------
    # chunk: in-kernel sub-tile / accumulator width — multiple of 128 whenever hw
    # allows it (lane-dense unmasked stores, bounded vreg live ranges).
    if hw < 128:
        ch = hw
    else:
        ch = max(128, min((chunk // 128) * 128, (hw // 128) * 128))
    # T: DMA tile (BlockSpec lane width) = several chunks, amortizes ~0.35us/step.
    blocks_per_tile = max(1, min(max(tile, ch) // ch, pl.cdiv(hw, ch)))
    T = ch * blocks_per_tile
    n_tiles = pl.cdiv(hw, T)

    # pixel-shard axis so both v7x TensorCores get work even when N is 1 / odd.
    # (pick the largest divisor of n_tiles <= max_shards so no wasted masked steps)
    n_shards = 1
    for cand in range(min(max_shards, n_tiles), 0, -1):
        if n_tiles % cand == 0:
            n_shards = cand
            break
    tps = n_tiles // n_shards

    # layout: reshape only (contiguous) — no transpose, no pad, NO dtype copies
    pred = prediction.reshape(N, C, hw)      # native dtype; cast per-chunk in-kernel
    tgt = target.reshape(N, 1, hw)           # native integer dtype; cast in-kernel

    kernel = functools.partial(
        _acw_kernel, eps=eps, ignore_index=ignore_index, hw=hw, chunk=ch,
        tiles_per_shard=tps, approx_reciprocal=approx_reciprocal)

    out_shape = tuple(jax.ShapeDtypeStruct((N, n_shards, C, ch), jnp.float32)
                      for _ in range(4))
    out_spec = pl.BlockSpec((None, None, C, ch), lambda n, s, i: (n, s, 0, 0))
    lane_map = lambda n, s, i: (n, 0, s * tps + i)

    cp_kwargs = dict(dimension_semantics=("parallel", "parallel", "arbitrary"))
    # double-buffered pred+tgt tiles + resident output slabs; raise the scoped VMEM
    # limit only for big-C / big-tile configs (headroom inside v7x's 64 MiB physical,
    # above v5e's 16 MiB scoped default).
    vmem_bytes = (2 * T * (C * jnp.dtype(prediction.dtype).itemsize
                           + jnp.dtype(target.dtype).itemsize)
                  + 8 * 4 * C * ch * 4)
    if vmem_bytes > 12 * 1024 * 1024:
        cp_kwargs["vmem_limit_bytes"] = int(min(2 * vmem_bytes, 56 * 1024 * 1024))
    # NOTE: if DMA is still exposed for small C / large T, add
    # pipeline_mode=pl.Buffered(3) on the prediction BlockSpec (cheap on v5e/v6e).

    s_out, inter_out, union_out, cnt_out = pl.pallas_call(
        kernel,
        out_shape=out_shape,
        grid=(N, n_shards, tps),
        in_specs=[
            pl.BlockSpec((None, C, T), lane_map),   # prediction slab (native dtype)
            pl.BlockSpec((None, 1, T), lane_map),   # target slab (native int dtype)
        ],
        out_specs=(out_spec, out_spec, out_spec, out_spec),
        compiler_params=pltpu.CompilerParams(**cp_kwargs),
    )(pred, tgt)

    # --- glue: reduce lane-dense partials, compute mfb and the final scalar ---
    S = jnp.sum(s_out, axis=(0, 1, 3))          # (C,) sum of (1+p+onehot)*pnc (masked)
    inter = jnp.sum(inter_out, axis=(0, 1, 3))  # (C,) sum of p*onehot
    union = jnp.sum(union_out, axis=(0, 1, 3))  # (C,) sum of masked p+onehot
    sum_class = jnp.sum(cnt_out, axis=(0, 1, 3))  # (C,) class counts

    itr = ini_iteration + 1                     # self.itr += 1 (single-call semantics)
    sum_norm = sum_class / jnp.sum(sum_class)
    weight = (ini_weight * (itr - 1) + sum_norm) / itr
    mfb = jnp.mean(weight) / (weight + eps)
    mfb = mfb / jnp.sum(mfb)
    mfb = jnp.clip(mfb, 0.001, 1.0)

    loss_pnc_mean = jnp.dot(mfb, S) / P         # mean over all N*H*W pixels
    dice = (2.0 * inter + eps) / (union + eps)
    return loss_pnc_mean - jnp.log(jnp.mean(dice))


# ----------------------------------------------------------------------------- reference

def acw_loss_ref(prediction, target, *, eps=1e-5, ignore_index=255,
                 ini_weight=0.0, ini_iteration=0):
    """Pure-JAX replica of ACWLoss.forward (single call, default init state)."""
    N, C, H, W = prediction.shape
    pred = jax.nn.softmax(prediction.astype(jnp.float32), axis=1)
    mask = (target == ignore_index)
    tgt = jnp.where(mask, 0, target)
    one_hot = jax.nn.one_hot(tgt, C, axis=1, dtype=jnp.float32)
    one_hot = jnp.where(mask[:, None], 0.0, one_hot)

    itr = ini_iteration + 1
    sum_class = jnp.sum(one_hot, axis=(0, 2, 3))
    sum_norm = sum_class / jnp.sum(sum_class)
    weight = (ini_weight * (itr - 1) + sum_norm) / itr
    mfb = jnp.mean(weight) / (weight + eps)
    mfb = mfb / jnp.sum(mfb)
    mfb = jnp.clip(mfb, 0.001, 1.0)

    acw = (1.0 + pred + one_hot) * mfb[None, :, None, None]
    acw = jnp.where(mask[:, None], 0.0, acw)
    err = (one_hot - pred) ** 2
    pnc = err - jnp.log((1.0 - err + eps) / (1.0 + err + eps))
    loss_pnc = jnp.sum(acw * pnc, axis=1)

    intersection = 2.0 * jnp.sum(pred * one_hot, axis=(0, 2, 3)) + eps
    union = jnp.where(mask[:, None], 0.0, pred + one_hot)
    union = jnp.sum(union, axis=(0, 2, 3)) + eps
    dice = intersection / union
    return jnp.mean(loss_pnc) - jnp.log(jnp.mean(dice))


# ----------------------------------------------------------------------------- main

if __name__ == "__main__":
    key = jax.random.PRNGKey(0)
    ks = jax.random.split(key, 9)

    # case 1: lane-aligned spatial size (H*W multiple of 128), f32 logits
    N, C, H, W = 2, 4, 16, 16
    pred1 = jax.random.normal(ks[0], (N, C, H, W), dtype=jnp.float32)
    tgt1 = jax.random.randint(ks[1], (N, H, W), 0, C, dtype=jnp.int32)
    tgt1 = jnp.where(jax.random.uniform(ks[2], (N, H, W)) < 0.1, 255, tgt1)  # ignore path

    loss_k1 = jax.block_until_ready(acw_loss_pallas(pred1, tgt1))
    loss_r1 = jax.block_until_ready(acw_loss_ref(pred1, tgt1))
    assert jnp.allclose(loss_k1, loss_r1, rtol=1e-4, atol=1e-5), (
        f"mismatch (aligned): kernel={loss_k1} ref={loss_r1}")

    # case 1b: approx-reciprocal softmax denominator (EUP fast path) — looser tolerance
    loss_k1a = jax.block_until_ready(acw_loss_pallas(pred1, tgt1, approx_reciprocal=True))
    assert jnp.allclose(loss_k1a, loss_r1, rtol=1e-2, atol=1e-3), (
        f"mismatch (approx recip): kernel={loss_k1a} ref={loss_r1}")

    # case 2: ragged spatial size (H*W not a multiple of the 128-wide lane chunk)
    N2, C2, H2, W2 = 2, 4, 15, 15
    pred2 = jax.random.normal(ks[3], (N2, C2, H2, W2), dtype=jnp.float32)
    tgt2 = jax.random.randint(ks[4], (N2, H2, W2), 0, C2, dtype=jnp.int32)
    tgt2 = jnp.where(jax.random.uniform(ks[5], (N2, H2, W2)) < 0.1, 255, tgt2)

    loss_k2 = jax.block_until_ready(acw_loss_pallas(pred2, tgt2))
    loss_r2 = jax.block_until_ready(acw_loss_ref(pred2, tgt2))
    assert jnp.allclose(loss_k2, loss_r2, rtol=1e-4, atol=1e-5), (
        f"mismatch (ragged): kernel={loss_k2} ref={loss_r2}")

    # case 3: bf16 logits (in-kernel cast), larger spatial size so the multi-chunk
    # inner loop and the pixel-shard ("parallel") grid axis are both exercised
    N3, C3, H3, W3 = 2, 4, 64, 64
    pred3 = jax.random.normal(ks[6], (N3, C3, H3, W3), dtype=jnp.float32).astype(jnp.bfloat16)
    tgt3 = jax.random.randint(ks[7], (N3, H3, W3), 0, C3, dtype=jnp.int32)
    tgt3 = jnp.where(jax.random.uniform(ks[8], (N3, H3, W3)) < 0.1, 255, tgt3)

    loss_k3 = jax.block_until_ready(acw_loss_pallas(pred3, tgt3))
    loss_r3 = jax.block_until_ready(acw_loss_ref(pred3, tgt3))
    assert jnp.allclose(loss_k3, loss_r3, rtol=5e-4, atol=1e-4), (
        f"mismatch (bf16/sharded): kernel={loss_k3} ref={loss_r3}")

    print("KERNEL_OK")
</pallas_src>

<mosaic_0001>
module attributes {stable_mosaic.version = 11 : i64} {
  func.func @_acw_kernel(%arg0: i32, %arg1: i32, %arg2: i32, %arg3: memref<1x4x256xf32, #tpu.memory_space<vmem>>, %arg4: memref<1x1x256xi32, #tpu.memory_space<vmem>>, %arg5: memref<1x1x4x256xf32, #tpu.memory_space<vmem>>, %arg6: memref<1x1x4x256xf32, #tpu.memory_space<vmem>>, %arg7: memref<1x1x4x256xf32, #tpu.memory_space<vmem>>, %arg8: memref<1x1x4x256xf32, #tpu.memory_space<vmem>>) attributes {dimension_semantics = [#tpu.dimension_semantics<parallel>, #tpu.dimension_semantics<parallel>, #tpu.dimension_semantics<arbitrary>], iteration_bounds = array<i64: 2, 1, 1>, scalar_prefetch = 0 : i64, scratch_operands = 0 : i64, tpu.core_type = #tpu.core_type<tc>, window_params = [{transform_indices = @transform_0, window_bounds = array<i64: 1, 4, 256>}, {transform_indices = @transform_1, window_bounds = array<i64: 1, 1, 256>}, {transform_indices = @transform_2, window_bounds = array<i64: 1, 1, 4, 256>}, {transform_indices = @transform_3, window_bounds = array<i64: 1, 1, 4, 256>}, {transform_indices = @transform_4, window_bounds = array<i64: 1, 1, 4, 256>}, {transform_indices = @transform_5, window_bounds = array<i64: 1, 1, 4, 256>}]} {
    %0 = tpu.iota {dimensions = array<i32: 0>} : vector<4x1xi32>
    %cst = arith.constant 0.000000e+00 : f32
    %1 = vector.broadcast %cst : f32 to vector<4x256xf32>
    %c0_i32 = arith.constant 0 : i32
    %c256_i32 = arith.constant 256 : i32
    %2 = arith.muli %c0_i32, %c256_i32 : i32
    %3 = tpu.assume_multiple %2, 256 : i32
    %c0 = arith.constant 0 : index
    %c0_0 = arith.constant 0 : index
    %4 = arith.index_cast %3 : i32 to index
    %5 = vector.load %arg3[%c0, %c0_0, %4] : memref<1x4x256xf32, #tpu.memory_space<vmem>>, vector<1x4x256xf32>
    %6 = vector.shape_cast %5 : vector<1x4x256xf32> to vector<4x256xf32>
    %c0_1 = arith.constant 0 : index
    %c0_2 = arith.constant 0 : index
    %7 = arith.index_cast %3 : i32 to index
    %8 = vector.load %arg4[%c0_1, %c0_2, %7] : memref<1x1x256xi32, #tpu.memory_space<vmem>>, vector<1x1x256xi32>
    %9 = vector.shape_cast %8 : vector<1x1x256xi32> to vector<1x256xi32>
    %cst_3 = arith.constant dense<0xFF800000> : vector<256xf32>
    %10 = vector.multi_reduction <maximumf>, %6, %cst_3 [0] : vector<4x256xf32> to vector<256xf32>
    %11 = vector.shape_cast %10 : vector<256xf32> to vector<1x256xf32>
    %12 = vector.broadcast %11 : vector<1x256xf32> to vector<4x256xf32>
    %13 = arith.subf %6, %12 : vector<4x256xf32>
    %14 = math.exp %13 : vector<4x256xf32>
    %cst_4 = arith.constant dense<0.000000e+00> : vector<256xf32>
    %15 = vector.multi_reduction <add>, %14, %cst_4 [0] : vector<4x256xf32> to vector<256xf32>
    %16 = vector.shape_cast %15 : vector<256xf32> to vector<1x256xf32>
    %cst_5 = arith.constant 1.000000e+00 : f32
    %17 = vector.broadcast %cst_5 : f32 to vector<1x256xf32>
    %18 = arith.divf %17, %16 : vector<1x256xf32>
    %19 = vector.broadcast %18 : vector<1x256xf32> to vector<4x256xf32>
    %20 = arith.mulf %14, %19 : vector<4x256xf32>
    %c255_i32 = arith.constant 255 : i32
    %21 = vector.broadcast %c255_i32 : i32 to vector<1x256xi32>
    %22 = arith.cmpi eq, %9, %21 : vector<1x256xi32>
    %23 = vector.broadcast %0 : vector<4x1xi32> to vector<4x256xi32>
    %24 = vector.broadcast %9 : vector<1x256xi32> to vector<4x256xi32>
    %25 = arith.cmpi eq, %23, %24 : vector<4x256xi32>
    %cst_6 = arith.constant dense<true> : vector<1x256xi1>
    %26 = arith.xori %22, %cst_6 : vector<1x256xi1>
    %27 = vector.broadcast %26 : vector<1x256xi1> to vector<4x256xi1>
    %28 = arith.andi %25, %27 : vector<4x256xi1>
    %29 = arith.extui %28 : vector<4x256xi1> to vector<4x256xi32>
    %30 = arith.sitofp %29 : vector<4x256xi32> to vector<4x256xf32>
    %31 = arith.subf %30, %20 : vector<4x256xf32>
    %32 = arith.mulf %31, %31 : vector<4x256xf32>
    %cst_7 = arith.constant 1.000000e+00 : f32
    %33 = vector.broadcast %cst_7 : f32 to vector<4x256xf32>
    %34 = arith.subf %33, %32 : vector<4x256xf32>
    %cst_8 = arith.constant 9.99999974E-6 : f32
    %35 = vector.broadcast %cst_8 : f32 to vector<4x256xf32>
    %36 = arith.addf %34, %35 : vector<4x256xf32>
    %37 = math.log %36 : vector<4x256xf32>
    %38 = arith.subf %32, %37 : vector<4x256xf32>
    %cst_9 = arith.constant 1.000000e+00 : f32
    %39 = vector.broadcast %cst_9 : f32 to vector<4x256xf32>
    %40 = arith.addf %39, %32 : vector<4x256xf32>
    %cst_10 = arith.constant 9.99999974E-6 : f32
    %41 = vector.broadcast %cst_10 : f32 to vector<4x256xf32>
    %42 = arith.addf %40, %41 : vector<4x256xf32>
    %43 = math.log %42 : vector<4x256xf32>
    %44 = arith.addf %38, %43 : vector<4x256xf32>
    %cst_11 = arith.constant 1.000000e+00 : f32
    %45 = vector.broadcast %cst_11 : f32 to vector<4x256xf32>
    %46 = arith.addf %45, %20 : vector<4x256xf32>
    %47 = arith.addf %46, %30 : vector<4x256xf32>
    %cst_12 = arith.constant 0.000000e+00 : f32
    %48 = vector.shape_cast %22 : vector<1x256xi1> to vector<1x256xi1>
    %49 = vector.broadcast %48 : vector<1x256xi1> to vector<4x256xi1>
    %50 = vector.broadcast %cst_12 : f32 to vector<4x256xf32>
    %51 = arith.select %49, %50, %47 : vector<4x256xi1>, vector<4x256xf32>
    %52 = arith.mulf %51, %44 : vector<4x256xf32>
    %53 = arith.addf %1, %52 : vector<4x256xf32>
    %cst_13 = arith.constant 0.000000e+00 : f32
    %54 = vector.broadcast %cst_13 : f32 to vector<4x256xf32>
    %55 = arith.select %28, %20, %54 : vector<4x256xi1>, vector<4x256xf32>
    %56 = arith.addf %1, %55 : vector<4x256xf32>
    %57 = arith.addf %20, %30 : vector<4x256xf32>
    %cst_14 = arith.constant 0.000000e+00 : f32
    %58 = vector.shape_cast %22 : vector<1x256xi1> to vector<1x256xi1>
    %59 = vector.broadcast %58 : vector<1x256xi1> to vector<4x256xi1>
    %60 = vector.broadcast %cst_14 : f32 to vector<4x256xf32>
    %61 = arith.select %59, %60, %57 : vector<4x256xi1>, vector<4x256xf32>
    %62 = arith.addf %1, %61 : vector<4x256xf32>
    %63 = arith.addf %1, %30 : vector<4x256xf32>
    %c1_i32 = arith.constant 1 : i32
    %c0_i32_15 = arith.constant 0 : i32
    %64 = arith.cmpi eq, %arg2, %c0_i32_15 : i32
    %65 = arith.extui %64 : i1 to i32
    %c0_i32_16 = arith.constant 0 : i32
    %66 = arith.cmpi ne, %65, %c0_i32_16 : i32
    scf.if %66 {
      %cst_49 = arith.constant 0.000000e+00 : f32
      %91 = vector.broadcast %cst_49 : f32 to vector<4x256xf32>
      %c0_50 = arith.constant 0 : index
      %c0_51 = arith.constant 0 : index
      %c0_52 = arith.constant 0 : index
      %c0_53 = arith.constant 0 : index
      %92 = vector.load %arg5[%c0_50, %c0_51, %c0_52, %c0_53] : memref<1x1x4x256xf32, #tpu.memory_space<vmem>>, vector<1x1x4x256xf32>
      %93 = vector.shape_cast %92 : vector<1x1x4x256xf32> to vector<4x256xf32>
      %94 = vector.shape_cast %91 : vector<4x256xf32> to vector<1x1x4x256xf32>
      tpu.vector_store %arg5[%c0_50, %c0_51, %c0_52, %c0_53], %94 {strides = array<i32>} : memref<1x1x4x256xf32, #tpu.memory_space<vmem>>, vector<1x1x4x256xf32>,
      %cst_54 = arith.constant 0.000000e+00 : f32
      %95 = vector.broadcast %cst_54 : f32 to vector<4x256xf32>
      %c0_55 = arith.constant 0 : index
      %c0_56 = arith.constant 0 : index
      %c0_57 = arith.constant 0 : index
      %c0_58 = arith.constant 0 : index
      %96 = vector.load %arg6[%c0_55, %c0_56, %c0_57, %c0_58] : memref<1x1x4x256xf32, #tpu.memory_space<vmem>>, vector<1x1x4x256xf32>
      %97 = vector.shape_cast %96 : vector<1x1x4x256xf32> to vector<4x256xf32>
      %98 = vector.shape_cast %95 : vector<4x256xf32> to vector<1x1x4x256xf32>
      tpu.vector_store %arg6[%c0_55, %c0_56, %c0_57, %c0_58], %98 {strides = array<i32>} : memref<1x1x4x256xf32, #tpu.memory_space<vmem>>, vector<1x1x4x256xf32>,
      %cst_59 = arith.constant 0.000000e+00 : f32
      %99 = vector.broadcast %cst_59 : f32 to vector<4x256xf32>
      %c0_60 = arith.constant 0 : index
      %c0_61 = arith.constant 0 : index
      %c0_62 = arith.constant 0 : index
      %c0_63 = arith.constant 0 : index
      %100 = vector.load %arg7[%c0_60, %c0_61, %c0_62, %c0_63] : memref<1x1x4x256xf32, #tpu.memory_space<vmem>>, vector<1x1x4x256xf32>
      %101 = vector.shape_cast %100 : vector<1x1x4x256xf32> to vector<4x256xf32>
      %102 = vector.shape_cast %99 : vector<4x256xf32> to vector<1x1x4x256xf32>
      tpu.vector_store %arg7[%c0_60, %c0_61, %c0_62, %c0_63], %102 {strides = array<i32>} : memref<1x1x4x256xf32, #tpu.memory_space<vmem>>, vector<1x1x4x256xf32>,
      %cst_64 = arith.constant 0.000000e+00 : f32
      %103 = vector.broadcast %cst_64 : f32 to vector<4x256xf32>
      %c0_65 = arith.constant 0 : index
      %c0_66 = arith.constant 0 : index
      %c0_67 = arith.constant 0 : index
      %c0_68 = arith.constant 0 : index
      %104 = vector.load %arg8[%c0_65, %c0_66, %c0_67, %c0_68] : memref<1x1x4x256xf32, #tpu.memory_space<vmem>>, vector<1x1x4x256xf32>
      %105 = vector.shape_cast %104 : vector<1x1x4x256xf32> to vector<4x256xf32>
      %106 = vector.shape_cast %103 : vector<4x256xf32> to vector<1x1x4x256xf32>
      tpu.vector_store %arg8[%c0_65, %c0_66, %c0_67, %c0_68], %106 {strides = array<i32>} : memref<1x1x4x256xf32, #tpu.memory_space<vmem>>, vector<1x1x4x256xf32>,
    } else {
    }
    %c0_17 = arith.constant 0 : index
    %c0_18 = arith.constant 0 : index
    %c0_19 = arith.constant 0 : index
    %c0_20 = arith.constant 0 : index
    %67 = vector.load %arg5[%c0_17, %c0_18, %c0_19, %c0_20] : memref<1x1x4x256xf32, #tpu.memory_space<vmem>>, vector<1x1x4x256xf32>
    %68 = vector.shape_cast %67 : vector<1x1x4x256xf32> to vector<4x256xf32>
    %69 = arith.addf %68, %53 : vector<4x256xf32>
    %c0_21 = arith.constant 0 : index
    %c0_22 = arith.constant 0 : index
    %c0_23 = arith.constant 0 : index
    %c0_24 = arith.constant 0 : index
    %70 = vector.load %arg5[%c0_21, %c0_22, %c0_23, %c0_24] : memref<1x1x4x256xf32, #tpu.memory_space<vmem>>, vector<1x1x4x256xf32>
    %71 = vector.shape_cast %70 : vector<1x1x4x256xf32> to vector<4x256xf32>
    %72 = vector.shape_cast %69 : vector<4x256xf32> to vector<1x1x4x256xf32>
    tpu.vector_store %arg5[%c0_21, %c0_22, %c0_23, %c0_24], %72 {strides = array<i32>} : memref<1x1x4x256xf32, #tpu.memory_space<vmem>>, vector<1x1x4x256xf32>,
    %c0_25 = arith.constant 0 : index
    %c0_26 = arith.constant 0 : index
    %c0_27 = arith.constant 0 : index
    %c0_28 = arith.constant 0 : index
    %73 = vector.load %arg6[%c0_25, %c0_26, %c0_27, %c0_28] : memref<1x1x4x256xf32, #tpu.memory_space<vmem>>, vector<1x1x4x256xf32>
    %74 = vector.shape_cast %73 : vector<1x1x4x256xf32> to vector<4x256xf32>
    %75 = arith.addf %74, %56 : vector<4x256xf32>
    %c0_29 = arith.constant 0 : index
    %c0_30 = arith.constant 0 : index
    %c0_31 = arith.constant 0 : index
    %c0_32 = arith.constant 0 : index
    %76 = vector.load %arg6[%c0_29, %c0_30, %c0_31, %c0_32] : memref<1x1x4x256xf32, #tpu.memory_space<vmem>>, vector<1x1x4x256xf32>
    %77 = vector.shape_cast %76 : vector<1x1x4x256xf32> to vector<4x256xf32>
    %78 = vector.shape_cast %75 : vector<4x256xf32> to vector<1x1x4x256xf32>
    tpu.vector_store %arg6[%c0_29, %c0_30, %c0_31, %c0_32], %78 {strides = array<i32>} : memref<1x1x4x256xf32, #tpu.memory_space<vmem>>, vector<1x1x4x256xf32>,
    %c0_33 = arith.constant 0 : index
    %c0_34 = arith.constant 0 : index
    %c0_35 = arith.constant 0 : index
    %c0_36 = arith.constant 0 : index
    %79 = vector.load %arg7[%c0_33, %c0_34, %c0_35, %c0_36] : memref<1x1x4x256xf32, #tpu.memory_space<vmem>>, vector<1x1x4x256xf32>
    %80 = vector.shape_cast %79 : vector<1x1x4x256xf32> to vector<4x256xf32>
    %81 = arith.addf %80, %62 : vector<4x256xf32>
    %c0_37 = arith.constant 0 : index
    %c0_38 = arith.constant 0 : index
    %c0_39 = arith.constant 0 : index
    %c0_40 = arith.constant 0 : index
    %82 = vector.load %arg7[%c0_37, %c0_38, %c0_39, %c0_40] : memref<1x1x4x256xf32, #tpu.memory_space<vmem>>, vector<1x1x4x256xf32>
    %83 = vector.shape_cast %82 : vector<1x1x4x256xf32> to vector<4x256xf32>
    %84 = vector.shape_cast %81 : vector<4x256xf32> to vector<1x1x4x256xf32>
    tpu.vector_store %arg7[%c0_37, %c0_38, %c0_39, %c0_40], %84 {strides = array<i32>} : memref<1x1x4x256xf32, #tpu.memory_space<vmem>>, vector<1x1x4x256xf32>,
    %c0_41 = arith.constant 0 : index
    %c0_42 = arith.constant 0 : index
    %c0_43 = arith.constant 0 : index
    %c0_44 = arith.constant 0 : index
    %85 = vector.load %arg8[%c0_41, %c0_42, %c0_43, %c0_44] : memref<1x1x4x256xf32, #tpu.memory_space<vmem>>, vector<1x1x4x256xf32>
    %86 = vector.shape_cast %85 : vector<1x1x4x256xf32> to vector<4x256xf32>
    %87 = arith.addf %86, %63 : vector<4x256xf32>
    %c0_45 = arith.constant 0 : index
    %c0_46 = arith.constant 0 : index
    %c0_47 = arith.constant 0 : index
    %c0_48 = arith.constant 0 : index
    %88 = vector.load %arg8[%c0_45, %c0_46, %c0_47, %c0_48] : memref<1x1x4x256xf32, #tpu.memory_space<vmem>>, vector<1x1x4x256xf32>
    %89 = vector.shape_cast %88 : vector<1x1x4x256xf32> to vector<4x256xf32>
    %90 = vector.shape_cast %87 : vector<4x256xf32> to vector<1x1x4x256xf32>
    tpu.vector_store %arg8[%c0_45, %c0_46, %c0_47, %c0_48], %90 {strides = array<i32>} : memref<1x1x4x256xf32, #tpu.memory_space<vmem>>, vector<1x1x4x256xf32>,
    return
  }
  func.func @transform_0(%arg0: i32, %arg1: i32, %arg2: i32) -> (i32, i32, i32) {
    %c1_i32 = arith.constant 1 : i32
    %0 = arith.muli %arg1, %c1_i32 : i32
    %1 = arith.addi %0, %arg2 : i32
    %c0_i32 = arith.constant 0 : i32
    %c0_i32_0 = arith.constant 0 : i32
    return %arg0, %c0_i32, %1 : i32, i32, i32
  }
  func.func @transform_1(%arg0: i32, %arg1: i32, %arg2: i32) -> (i32, i32, i32) {
    %c1_i32 = arith.constant 1 : i32
    %0 = arith.muli %arg1, %c1_i32 : i32
    %1 = arith.addi %0, %arg2 : i32
    %c0_i32 = arith.constant 0 : i32
    %c0_i32_0 = arith.constant 0 : i32
    return %arg0, %c0_i32, %1 : i32, i32, i32
  }
  func.func @transform_2(%arg0: i32, %arg1: i32, %arg2: i32) -> (i32, i32, i32, i32) {
    %c0_i32 = arith.constant 0 : i32
    %c0_i32_0 = arith.constant 0 : i32
    %c0_i32_1 = arith.constant 0 : i32
    return %arg0, %arg1, %c0_i32, %c0_i32_0 : i32, i32, i32, i32
  }
  func.func @transform_3(%arg0: i32, %arg1: i32, %arg2: i32) -> (i32, i32, i32, i32) {
    %c0_i32 = arith.constant 0 : i32
    %c0_i32_0 = arith.constant 0 : i32
    %c0_i32_1 = arith.constant 0 : i32
    return %arg0, %arg1, %c0_i32, %c0_i32_0 : i32, i32, i32, i32
  }
  func.func @transform_4(%arg0: i32, %arg1: i32, %arg2: i32) -> (i32, i32, i32, i32) {
    %c0_i32 = arith.constant 0 : i32
    %c0_i32_0 = arith.constant 0 : i32
    %c0_i32_1 = arith.constant 0 : i32
    return %arg0, %arg1, %c0_i32, %c0_i32_0 : i32, i32, i32, i32
  }
  func.func @transform_5(%arg0: i32, %arg1: i32, %arg2: i32) -> (i32, i32, i32, i32) {
    %c0_i32 = arith.constant 0 : i32
    %c0_i32_0 = arith.constant 0 : i32
    %c0_i32_1 = arith.constant 0 : i32
    return %arg0, %arg1, %c0_i32, %c0_i32_0 : i32, i32, i32, i32
  }
}

</mosaic_0001>

<llo_original>
// kernel: tpu_custom_call.1
$region0: #{tpu_custom_call.1}
  #allocation0 [shape = 'u32[]', space=smem, size = 0x4, offset = 0x4, fixed_abs, tag = 'smem constant byte address 0x4 - core index']
  #allocation1 [shape = 'u32[144,128]{1,0:T(1,128)}', space=vmem, size = 0x12000, scoped, tag = 'internal scratch']
  %s0 = inlined_call_operand.hbm [shape: f32[2,4,256], index: 0, kind: input, shape index: {}]
  %s1 = inlined_call_operand.hbm [shape: s32[2,1,256], index: 1, kind: input, shape index: {}]
  %s2 = inlined_call_operand.hbm [shape: f32[2,1,4,256], index: 2, kind: output, shape index: {0}]
  %s3 = inlined_call_operand.hbm [shape: f32[2,1,4,256], index: 3, kind: output, shape index: {1}]
  %s4 = inlined_call_operand.hbm [shape: f32[2,1,4,256], index: 4, kind: output, shape index: {2}]
  %s5 = inlined_call_operand.hbm [shape: f32[2,1,4,256], index: 5, kind: output, shape index: {3}]
  %6 = xla_tuple %s2, %s3, %s4, %s5
  %s7 = sld [smem:[#allocation0]]
  $region77: #{tpu_custom_call.1} parent=0
    _
  %s9 = ssub.s32 1, %s7
  %s10 = scalar_select 0, %s9, %s7
  $region1: #{tpu_custom_call.1} parent=0
    #allocation2 [shape = 'u8[8192]{0}', space=vmem, size = 0x2000, scoped, tag = 'input window, operand 0']
    #allocation3 [shape = 's32[2]{0}', space=sflag, size = 0x8, scoped, tag = 'scoped memory for tpu_custom_call.1']
    #allocation4 [shape = 's32[2]{0}', space=sflag, size = 0x8, scoped, tag = 'scoped memory for tpu_custom_call.1']
    #allocation5 [shape = 'u8[2048]{0}', space=vmem, size = 0x800, scoped, tag = 'input window, operand 1']
    #allocation6 [shape = 's32[2]{0}', space=sflag, size = 0x8, scoped, tag = 'scoped memory for tpu_custom_call.1']
    #allocation7 [shape = 'u8[8192]{0}', space=vmem, size = 0x2000, scoped, tag = 'output window, operand 0']
    #allocation8 [shape = 'u8[8192]{0}', space=vmem, size = 0x2000, scoped, tag = 'output window, operand 1']
    #allocation9 [shape = 's32[2]{0}', space=sflag, size = 0x8, scoped, tag = 'scoped memory for tpu_custom_call.1']
    #allocation10 [shape = 'u8[8192]{0}', space=vmem, size = 0x2000, scoped, tag = 'output window, operand 2']
    #allocation11 [shape = 'u8[8192]{0}', space=vmem, size = 0x2000, scoped, tag = 'output window, operand 3']
    #allocation12 [shape = 's32[2]{0}', space=sflag, size = 0x8, scoped, tag = 'scoped memory for tpu_custom_call.1']
    %11 = vsyncpa [#allocation3], 0
    %s12 = scalar_lea.sflag [#allocation3], 1
    %13 = vsyncpa %s12, 0
    %14 = vsyncpa [#allocation6], 0
    %s15 = scalar_lea.sflag [#allocation6], 1
    %16 = vsyncpa %s15, 0
    %17 = vsyncpa [#allocation4], 0
    %s18 = scalar_lea.sflag [#allocation4], 1
    %19 = vsyncpa %s18, 0
    %20 = vsyncpa [#allocation9], 0
    %s21 = scalar_lea.sflag [#allocation9], 1
    %22 = vsyncpa %s21, 0
    %23 = vsyncpa [#allocation12], 0
    %s24 = scalar_lea.sflag [#allocation12], 1
    %25 = vsyncpa %s24, 0
    loop: start=0, step=1, limit=4
    $region2: #{tpu_custom_call.1} parent=1 // loop_pre_header
      _
    $region3: #{tpu_custom_call.1} parent=1 // loop_header
      %s27 = sphi 0, %s31
      %p28 = scmp.ge.s32.totalorder %s27, 4
      %s34 = sphi 0, %s53
      %s35 = sphi 0, %s49
      %s36 = sphi 0, %s45
      %s37 = sphi 0, %s34
      %s38 = sphi 0, %s35
      %s39 = sphi 0, %s36
      %s40 = sphi 0, %s37
      %s41 = sphi 0, %s38
      %s42 = sphi 0, %s39
      %s60 = sphi 0, %s62
      %s63 = sphi 0, %s60
      %s64 = sphi 0, %s63
      %s80 = sphi 0, %s64
      %s90 = sphi 0, %s92
      %s93 = sphi 0, %s90
      %s94 = sphi 0, %s93
      %s110 = sphi 0, %s94
      %s118 = sphi 0, %s120
      %s121 = sphi 0, %s118
      %s122 = sphi 0, %s121
      %s138 = sphi 0, %s122
      %s146 = sphi 0, %s148
      %s149 = sphi 0, %s146
      %s150 = sphi 0, %s149
      %s166 = sphi 0, %s150
      %s174 = sphi 0, %s176
      %s177 = sphi 0, %s174
      %s178 = sphi 0, %s177
      %s194 = sphi 0, %s178
      %s202 = sphi 0, %s204
      %s205 = sphi 0, %s202
      %s206 = sphi 0, %s205
      %s222 = sphi 0, %s206
    $region4: #{tpu_custom_call.1} parent=1 // loop_header_branch
      %30 = sbr.rel (%p28) target = $region8
    $region5: #{tpu_custom_call.1} parent=1 // loop_body
      %s32 = ssub.s32 %s27, 1
      %s33 = ssub.s32 %s27, 2
      %s43 = sadd.s32 1, %s36
      %p44 = scmp.ge.s32.totalorder %s43, 1
      %s45 = scalar_select %p44, 0, %s43
      %s46 = sadd.s32 1, %s35
      %s47 = scalar_select %p44, %s46, %s35
      %p48 = scmp.ge.s32.totalorder %s47, 1
      %s49 = scalar_select %p48, 0, %s47
      %s50 = sadd.s32 1, %s34
      %s51 = scalar_select %p48, %s50, %s34
      %p52 = scmp.ge.s32.totalorder %s51, 2
      %s53 = scalar_select %p52, 0, %s51
      %s54 = sadd.s32 %s35, %s36
      %s55 = sadd.s32 %s49, %s45
      %s56 = ssub.s32 %s34, %s53
      %s57 = ssub.s32 %s54, %s55
      %s58 = sor.u32 %s56, %s57
      %p59 = scmp.eq.s32.totalorder %s58, 0
      %s61 = sadd.s32 %s60, 1
      %s62 = scalar_select %p59, %s60, %s61
      %p65 = pneg %p59
      %p66 = scmp.eq.s32.totalorder %s27, 1
      %p67 = por %p65, %p66
      %p68 = scmp.ne.s32.totalorder %s60, %s63
      %p69 = scmp.eq.s32.totalorder %s27, 0
      %p70 = por %p68, %p69
      %p71 = scmp.ne.s32.totalorder %s60, %s63
      %p72 = scmp.eq.s32.totalorder %s32, 1
      %p73 = por %p71, %p72
      %p74 = scmp.ne.s32.totalorder %s63, %s64
      %p75 = scmp.eq.s32.totalorder %s32, 0
      %p76 = por %p74, %p75
      %p77 = scmp.ne.s32.totalorder %s63, %s64
      %p78 = scmp.eq.s32.totalorder %s33, 1
      %p79 = por %p77, %p78
      %p81 = scmp.ne.s32.totalorder %s64, %s80
      %p82 = scmp.eq.s32.totalorder %s33, 0
      %p83 = por %p81, %p82
      %s84 = sadd.s32 %s35, %s36
      %s85 = sadd.s32 %s49, %s45
      %s86 = ssub.s32 %s34, %s53
      %s87 = ssub.s32 %s84, %s85
      %s88 = sor.u32 %s86, %s87
      %p89 = scmp.eq.s32.totalorder %s88, 0
      %s91 = sadd.s32 %s90, 1
      %s92 = scalar_select %p89, %s90, %s91
      %p95 = pneg %p89
      %p96 = scmp.eq.s32.totalorder %s27, 1
      %p97 = por %p95, %p96
      %p98 = scmp.ne.s32.totalorder %s90, %s93
      %p99 = scmp.eq.s32.totalorder %s27, 0
      %p100 = por %p98, %p99
      %p101 = scmp.ne.s32.totalorder %s90, %s93
      %p102 = scmp.eq.s32.totalorder %s32, 1
      %p103 = por %p101, %p102
      %p104 = scmp.ne.s32.totalorder %s93, %s94
      %p105 = scmp.eq.s32.totalorder %s32, 0
      %p106 = por %p104, %p105
      %p107 = scmp.ne.s32.totalorder %s93, %s94
      %p108 = scmp.eq.s32.totalorder %s33, 1
      %p109 = por %p107, %p108
      %p111 = scmp.ne.s32.totalorder %s94, %s110
      %p112 = scmp.eq.s32.totalorder %s33, 0
      %p113 = por %p111, %p112
      %s114 = ssub.s32 %s34, %s53
      %s115 = ssub.s32 %s35, %s49
      %s116 = sor.u32 %s114, %s115
      %p117 = scmp.eq.s32.totalorder %s116, 0
      %s119 = sadd.s32 %s118, 1
      %s120 = scalar_select %p117, %s118, %s119
      %p123 = pneg %p117
      %p124 = scmp.eq.s32.totalorder %s27, 1
      %p125 = por %p123, %p124
      %p126 = scmp.ne.s32.totalorder %s118, %s121
      %p127 = scmp.eq.s32.totalorder %s27, 0
      %p128 = por %p126, %p127
      %p129 = scmp.ne.s32.totalorder %s118, %s121
      %p130 = scmp.eq.s32.totalorder %s32, 1
      %p131 = por %p129, %p130
      %p132 = scmp.ne.s32.totalorder %s121, %s122
      %p133 = scmp.eq.s32.totalorder %s32, 0
      %p134 = por %p132, %p133
      %p135 = scmp.ne.s32.totalorder %s121, %s122
      %p136 = scmp.eq.s32.totalorder %s33, 1
      %p137 = por %p135, %p136
      %p139 = scmp.ne.s32.totalorder %s122, %s138
      %p140 = scmp.eq.s32.totalorder %s33, 0
      %p141 = por %p139, %p140
      %s142 = ssub.s32 %s34, %s53
      %s143 = ssub.s32 %s35, %s49
      %s144 = sor.u32 %s142, %s143
      %p145 = scmp.eq.s32.totalorder %s144, 0
      %s147 = sadd.s32 %s146, 1
      %s148 = scalar_select %p145, %s146, %s147
      %p151 = pneg %p145
      %p152 = scmp.eq.s32.totalorder %s27, 1
      %p153 = por %p151, %p152
      %p154 = scmp.ne.s32.totalorder %s146, %s149
      %p155 = scmp.eq.s32.totalorder %s27, 0
      %p156 = por %p154, %p155
      %p157 = scmp.ne.s32.totalorder %s146, %s149
      %p158 = scmp.eq.s32.totalorder %s32, 1
      %p159 = por %p157, %p158
      %p160 = scmp.ne.s32.totalorder %s149, %s150
      %p161 = scmp.eq.s32.totalorder %s32, 0
      %p162 = por %p160, %p161
      %p163 = scmp.ne.s32.totalorder %s149, %s150
      %p164 = scmp.eq.s32.totalorder %s33, 1
      %p165 = por %p163, %p164
      %p167 = scmp.ne.s32.totalorder %s150, %s166
      %p168 = scmp.eq.s32.totalorder %s33, 0
      %p169 = por %p167, %p168
      %s170 = ssub.s32 %s34, %s53
      %s171 = ssub.s32 %s35, %s49
      %s172 = sor.u32 %s170, %s171
      %p173 = scmp.eq.s32.totalorder %s172, 0
      %s175 = sadd.s32 %s174, 1
      %s176 = scalar_select %p173, %s174, %s175
      %p179 = pneg %p173
      %p180 = scmp.eq.s32.totalorder %s27, 1
      %p181 = por %p179, %p180
      %p182 = scmp.ne.s32.totalorder %s174, %s177
      %p183 = scmp.eq.s32.totalorder %s27, 0
      %p184 = por %p182, %p183
      %p185 = scmp.ne.s32.totalorder %s174, %s177
      %p186 = scmp.eq.s32.totalorder %s32, 1
      %p187 = por %p185, %p186
      %p188 = scmp.ne.s32.totalorder %s177, %s178
      %p189 = scmp.eq.s32.totalorder %s32, 0
      %p190 = por %p188, %p189
      %p191 = scmp.ne.s32.totalorder %s177, %s178
      %p192 = scmp.eq.s32.totalorder %s33, 1
      %p193 = por %p191, %p192
      %p195 = scmp.ne.s32.totalorder %s178, %s194
      %p196 = scmp.eq.s32.totalorder %s33, 0
      %p197 = por %p195, %p196
      %s198 = ssub.s32 %s34, %s53
      %s199 = ssub.s32 %s35, %s49
      %s200 = sor.u32 %s198, %s199
      %p201 = scmp.eq.s32.totalorder %s200, 0
      %s203 = sadd.s32 %s202, 1
      %s204 = scalar_select %p201, %s202, %s203
      %p207 = pneg %p201
      %p208 = scmp.eq.s32.totalorder %s27, 1
      %p209 = por %p207, %p208
      %p210 = scmp.ne.s32.totalorder %s202, %s205
      %p211 = scmp.eq.s32.totalorder %s27, 0
      %p212 = por %p210, %p211
      %p213 = scmp.ne.s32.totalorder %s202, %s205
      %p214 = scmp.eq.s32.totalorder %s32, 1
      %p215 = por %p213, %p214
      %p216 = scmp.ne.s32.totalorder %s205, %s206
      %p217 = scmp.eq.s32.totalorder %s32, 0
      %p218 = por %p216, %p217
      %p219 = scmp.ne.s32.totalorder %s205, %s206
      %p220 = scmp.eq.s32.totalorder %s33, 1
      %p221 = por %p219, %p220
      %p223 = scmp.ne.s32.totalorder %s206, %s222
      %p224 = scmp.eq.s32.totalorder %s33, 0
      %p225 = por %p223, %p224
      %p226 = scmp.le.s32.totalorder 1, %s27
      %p227 = scmp.lt.s32.totalorder %s27, 3
      %p228 = pnand %p226, %p227
      %p229 = pneg %p228
      // Predicated region
      $region9: #{tpu_custom_call.1} parent=5 // pred_check
        _
      $region10: #{tpu_custom_call.1} parent=5 // pred_check_branch
        %231 = sbr.rel (%p228) target = $region12
      $region11: #{tpu_custom_call.1} parent=5 // pred_region
        %s232 = ssub.s32 %s27, 1
      $region12: #{tpu_custom_call.1} parent=5 // pred_fallthru
        _
      %p233 = scmp.lt.s32.totalorder %s27, 2
      // Predicated region
      $region13: #{tpu_custom_call.1} parent=5 // pred_check
        %p234 = pneg %p233
      $region14: #{tpu_custom_call.1} parent=5 // pred_check_branch
        %236 = sbr.rel (%p234) target = $region16
      $region15: #{tpu_custom_call.1} parent=5 // pred_region
        // Predicated region
        $region17: #{tpu_custom_call.1} parent=15 // pred_check
          %p237 = pneg %p70
        $region18: #{tpu_custom_call.1} parent=15 // pred_check_branch
          %239 = sbr.rel (%p237) target = $region20
        $region19: #{tpu_custom_call.1} parent=15 // pred_region
          %s240 = sand.u32 %s60, 1
          %s241 = scalar_lea.sflag [#allocation3], %s240
          %s242 = sand.u32 %s60, 1
          %s243 = smul.addr %s242, 8
          %s244 = scalar_lea.vmem [#allocation2], %s243
          %s245 = sadd.s32 %s35, %s36
          %s246 = smul.u32 2, %s245
          %s248 = ssub.s32 128, 128
          %249 = vsyncadd %s241, %s248
          %s250 = smul.addr %s34, 2
          %s251 = sadd.s32 %s246, %s250
          %s252 = smul.addr %s251, 64
          %s253 = scalar_lea.hbm %s0, %s252
          %s255 = sshll.u32 %s244, 4
          %s256 = int_to_ptr.vmem [resolvable:$true] %s255
          %258 = dma.hbm_to_vmem [thread:$0]  %s253, 128, %s256, %s241
        $region20: #{tpu_custom_call.1} parent=15 // pred_fallthru
          _
        // Predicated region
        $region21: #{tpu_custom_call.1} parent=15 // pred_check
          %p259 = pneg %p100
        $region22: #{tpu_custom_call.1} parent=15 // pred_check_branch
          %261 = sbr.rel (%p259) target = $region24
        $region23: #{tpu_custom_call.1} parent=15 // pred_region
          %s262 = sand.u32 %s90, 1
          %s263 = scalar_lea.sflag [#allocation6], %s262
          %s264 = sand.u32 %s90, 1
          %s265 = smul.addr %s264, 2
          %s266 = scalar_lea.vmem [#allocation5], %s265
          %s267 = sadd.s32 %s35, %s36
          %s268 = smul.u32 2, %s267
          %s270 = ssub.s32 32, 32
          %271 = vsyncadd %s263, %s270
          %s272 = smul.addr %s34, 2
          %s273 = sadd.s32 %s268, %s272
          %s274 = smul.addr %s273, 16
          %s275 = scalar_lea.hbm %s1, %s274
          %s277 = sshll.u32 %s266, 4
          %s278 = int_to_ptr.vmem [resolvable:$true] %s277
          %280 = dma.hbm_to_vmem [thread:$0]  %s275, 32, %s278, %s263
        $region24: #{tpu_custom_call.1} parent=15 // pred_fallthru
          _
      $region16: #{tpu_custom_call.1} parent=5 // pred_fallthru
        _
      %p281 = scmp.le.s32.totalorder 1, %s27
      %p282 = scmp.lt.s32.totalorder %s27, 3
      %p283 = pnand %p281, %p282
      %p284 = pneg %p283
      // Predicated region
      $region25: #{tpu_custom_call.1} parent=5 // pred_check
        _
      $region26: #{tpu_custom_call.1} parent=5 // pred_check_branch
        %286 = sbr.rel (%p283) target = $region28
      $region27: #{tpu_custom_call.1} parent=5 // pred_region
        %s287 = ssub.s32 %s27, 1
        %s288 = sand.u32 %s63, 1
        %s289 = scalar_lea.sflag [#allocation3], %s288
        %s290 = sand.u32 %s63, 1
        %s291 = smul.addr %s290, 8
        %s292 = scalar_lea.vmem [#allocation2], %s291
        // Predicated region
        $region29: #{tpu_custom_call.1} parent=27 // pred_check
          %p293 = pneg %p76
        $region30: #{tpu_custom_call.1} parent=27 // pred_check_branch
          %295 = sbr.rel (%p293) target = $region32
        $region31: #{tpu_custom_call.1} parent=27 // pred_region
          %296 = dma.done %s289, 128
        $region32: #{tpu_custom_call.1} parent=27 // pred_fallthru
          _
        %s297 = sand.u32 %s93, 1
        %s298 = scalar_lea.sflag [#allocation6], %s297
        %s299 = sand.u32 %s93, 1
        %s300 = smul.addr %s299, 2
        %s301 = scalar_lea.vmem [#allocation5], %s300
        // Predicated region
        $region33: #{tpu_custom_call.1} parent=27 // pred_check
          %p302 = pneg %p106
        $region34: #{tpu_custom_call.1} parent=27 // pred_check_branch
          %304 = sbr.rel (%p302) target = $region36
        $region35: #{tpu_custom_call.1} parent=27 // pred_region
          %305 = dma.done %s298, 32
        $region36: #{tpu_custom_call.1} parent=27 // pred_fallthru
          _
        %s306 = sand.u32 %s63, 1
        %s307 = scalar_lea.sflag [#allocation3], %s306
        %s308 = sand.u32 %s63, 1
        %s309 = smul.addr %s308, 8
        %s310 = scalar_lea.vmem [#allocation2], %s309
        %p311 = pneg %p76
        %p312 = pneg %p73
        %s313 = sand.u32 %s93, 1
        %s314 = scalar_lea.sflag [#allocation6], %s313
        %s315 = sand.u32 %s93, 1
        %s316 = smul.addr %s315, 2
        %s317 = scalar_lea.vmem [#allocation5], %s316
        %p318 = pneg %p106
        %p319 = pneg %p103
        %p320 = pneg %p134
        %p321 = pneg %p131
        %s322 = sand.u32 %s121, 1
        %s323 = scalar_lea.sflag [#allocation4], %s322
        %s324 = sand.u32 %s121, 1
        %s325 = smul.addr %s324, 8
        %s326 = scalar_lea.vmem [#allocation7], %s325
        %p327 = pneg %p162
        %p328 = pneg %p159
        %s329 = sand.u32 %s32, 1
        %s330 = scalar_lea.sflag [#allocation9], %s329
        %s331 = sand.u32 %s149, 1
        %s332 = smul.addr %s331, 8
        %s333 = scalar_lea.vmem [#allocation8], %s332
        %p334 = pneg %p190
        %p335 = pneg %p187
        %s336 = sand.u32 %s32, 1
        %s337 = scalar_lea.sflag [#allocation9], %s336
        %s338 = sand.u32 %s177, 1
        %s339 = smul.addr %s338, 8
        %s340 = scalar_lea.vmem [#allocation10], %s339
        %p341 = pneg %p218
        %p342 = pneg %p215
        %s343 = sand.u32 %s205, 1
        %s344 = scalar_lea.sflag [#allocation12], %s343
        %s345 = sand.u32 %s205, 1
        %s346 = smul.addr %s345, 8
        %s347 = scalar_lea.vmem [#allocation11], %s346
        %s348 = sadd.s32 %s38, %s39
        %s349 = smul.u32 2, %s348
        %s350 = sadd.s32 %s38, %s39
        %s351 = smul.u32 2, %s350
        %v352 = vlaneseq
        %v353 = vshrl.u32 %v352, 7
        %v354 = vld [vmem:[%s292] sm:$0xff]
        %v355 = vld [vmem:[%s301] sm:$0x3]
        %v357 = vcombine.high %v354, %v354
        %vm359 = vcmask 1043456
        %v360 = vsel %vm359, %v354, -inf
        %v361 = vrot.slane %v360, 4
        %v362 = vmax.f32 %v360, %v361
        %v363 = vrot.slane %v362, 2
        %v364 = vmax.f32 %v362, %v363
        %v365 = vrot.slane %v364, 1
        %v366 = vmax.f32 %v364, %v365
        %v367 = vsel %vm359, %v357, -inf
        %v368 = vrot.slane %v367, 4
        %v369 = vmax.f32 %v367, %v368
        %v370 = vrot.slane %v369, 2
        %v371 = vmax.f32 %v369, %v370
        %v372 = vrot.slane %v371, 1
        %v373 = vmax.f32 %v371, %v372
        %v376 = vcombine.low %v366, %v373
        %v378 = vsub.f32 %v354, %v376
        %v379 = vmul.f32 %v378, 1.442695
        %v380 = vpow.pop %v379
        %v382 = vcombine.high %v380, %v380
        %v384 = vsel %vm359, %v380, 0.0
        %v385 = vrot.slane %v384, 4
        %v386 = vadd.f32 %v384, %v385
        %v387 = vrot.slane %v386, 2
        %v388 = vadd.f32 %v386, %v387
        %v389 = vrot.slane %v388, 1
        %v390 = vadd.f32 %v388, %v389
        %v391 = vsel %vm359, %v382, 0.0
        %v392 = vrot.slane %v391, 4
        %v393 = vadd.f32 %v391, %v392
        %v394 = vrot.slane %v393, 2
        %v395 = vadd.f32 %v393, %v394
        %v396 = vrot.slane %v395, 1
        %v397 = vadd.f32 %v395, %v396
        %v398 = vrcp.pop %v390
        %v399 = vmul.f32 1.0, %v398
        %v400 = vrcp.pop %v397
        %v401 = vmul.f32 1.0, %v400
        %v404 = vcombine.low %v399, %v401
        %v406 = vmul.f32 %v380, %v404
        %vm407 = vcmp.eq.s32.totalorder %v355, 255
        %v408 = vlaneseq
        %v409 = vshrl.u32 %v408, 7
        %v410 = vsub.s32 0, %v409
        %v411 = vrot.slane %v355, %v410
        %v412 = vlaneseq
        %v413 = vshrl.u32 %v412, 7
        %v414 = vsub.s32 1, %v413
        %v415 = vrot.slane %v355, %v414
        %vm416 = vcmp.eq.s32.totalorder %v353, %v411
        %vm417 = vcmp.eq.s32.totalorder %v353, %v415
        %vm418 = vmxor %vm407, 1
        %v419 = vsel %vm418, 1, 0
        %v420 = vlaneseq
        %v421 = vshrl.u32 %v420, 7
        %v422 = vsub.s32 0, %v421
        %v423 = vrot.slane %v419, %v422
        %v424 = vlaneseq
        %v425 = vshrl.u32 %v424, 7
        %v426 = vsub.s32 1, %v425
        %v427 = vrot.slane %v419, %v426
        %vm428 = vcmp.eq.s32.totalorder %v423, 1
        %vm429 = vcmp.eq.s32.totalorder %v427, 1
        %vm430 = vmand %vm416, %vm428
        %vm431 = vmand %vm417, %vm429
        %v432 = vsel %vm430, 1, 0
        %v433 = vsel %vm431, 1, 0
        %v434 = vcvt.s32.f32 %v432
        %v435 = vcvt.s32.f32 %v433
        %v437 = vcombine.high %v406, %v406
        %v439 = vsub.f32 %v434, %v406
        %v440 = vsub.f32 %v435, %v437
        %v441 = vmul.f32 %v439, %v439
        %v442 = vmul.f32 %v440, %v440
        %v443 = vsub.f32 1.0, %v441
        %v444 = vsub.f32 1.0, %v442
        %v445 = vadd.f32 %v443, 1e-05
        %v446 = vadd.f32 %v444, 1e-05
        %v447 = vlog2.pop %v445
        %v448 = vmul.f32 %v447, 0.6931472
        %v449 = vlog2.pop %v446
        %v450 = vmul.f32 %v449, 0.6931472
        %v451 = vsub.f32 %v441, %v448
        %v452 = vsub.f32 %v442, %v450
        %v453 = vadd.f32 %v441, 1.0
        %v454 = vadd.f32 %v442, 1.0
        %v455 = vadd.f32 %v453, 1e-05
        %v456 = vadd.f32 %v454, 1e-05
        %v457 = vlog2.pop %v455
        %v458 = vmul.f32 %v457, 0.6931472
        %v459 = vlog2.pop %v456
        %v460 = vmul.f32 %v459, 0.6931472
        %v461 = vadd.f32 %v451, %v458
        %v462 = vadd.f32 %v452, %v460
        %v463 = vadd.f32 %v406, 1.0
        %v466 = vcombine.low %v434, %v435
        %v468 = vadd.f32 %v463, %v466
        %v469 = vsel %vm407, 1, 0
        %v470 = vlaneseq
        %v471 = vshrl.u32 %v470, 7
        %v472 = vsub.s32 0, %v471
        %v473 = vrot.slane %v469, %v472
        %v474 = vlaneseq
        %v475 = vshrl.u32 %v474, 7
        %v476 = vsub.s32 1, %v475
        %v477 = vrot.slane %v469, %v476
        %vm478 = vcmp.eq.s32.totalorder %v473, 1
        %vm479 = vcmp.eq.s32.totalorder %v477, 1
        %v481 = vcombine.high %v468, %v468
        %v483 = vsel %vm478, 0.0, %v468
        %v484 = vsel %vm479, 0.0, %v481
        %v485 = vmul.f32 %v483, %v461
        %v486 = vmul.f32 %v484, %v462
        %v487 = vadd.f32 %v485, 0.0
        %v488 = vadd.f32 %v486, 0.0
        %v489 = vsel %vm430, %v406, 0.0
        %v490 = vsel %vm431, %v437, 0.0
        %v491 = vadd.f32 %v489, 0.0
        %v492 = vadd.f32 %v490, 0.0
        %v493 = vadd.f32 %v406, %v466
        %v495 = vcombine.high %v493, %v493
        %v497 = vsel %vm478, 0.0, %v493
        %v498 = vsel %vm479, 0.0, %v495
        %v499 = vadd.f32 %v497, 0.0
        %v500 = vadd.f32 %v498, 0.0
        %v501 = vadd.f32 %v434, 0.0
        %v502 = vadd.f32 %v435, 0.0
        %p503 = scmp.eq.s32.totalorder %s39, 0
        // Predicated region
        $region37: #{tpu_custom_call.1} parent=27 // pred_check
          %p504 = pneg %p503
        $region38: #{tpu_custom_call.1} parent=27 // pred_check_branch
          %506 = sbr.rel (%p504) target = $region40
        $region39: #{tpu_custom_call.1} parent=27 // pred_region
          %507 = vst [vmem:[%s326] sm:$0xff] 0.0
          %508 = vst [vmem:[%s333] sm:$0xff] 0.0
          %509 = vst [vmem:[%s340] sm:$0xff] 0.0
          %510 = vst [vmem:[%s347] sm:$0xff] 0.0
        $region40: #{tpu_custom_call.1} parent=27 // pred_fallthru
          _
        %v511 = vld [vmem:[%s326] sm:$0xff]
        %v514 = vcombine.low %v487, %v488
        %v516 = vadd.f32 %v511, %v514
        %517 = vst [vmem:[%s326] sm:$0xff] %v516
        %v518 = vld [vmem:[%s333] sm:$0xff]
        %v521 = vcombine.low %v491, %v492
        %v523 = vadd.f32 %v518, %v521
        %524 = vst [vmem:[%s333] sm:$0xff] %v523
        %v525 = vld [vmem:[%s340] sm:$0xff]
        %v528 = vcombine.low %v499, %v500
        %v530 = vadd.f32 %v525, %v528
        %531 = vst [vmem:[%s340] sm:$0xff] %v530
        %v532 = vld [vmem:[%s347] sm:$0xff]
        %v535 = vcombine.low %v501, %v502
        %v537 = vadd.f32 %v532, %v535
        %538 = vst [vmem:[%s347] sm:$0xff] %v537
        %s539 = sand.u32 %s121, 1
        %s540 = scalar_lea.sflag [#allocation4], %s539
        %s541 = sand.u32 %s121, 1
        %s542 = smul.addr %s541, 8
        %s543 = scalar_lea.vmem [#allocation7], %s542
        %s544 = sand.u32 %s32, 1
        %s545 = scalar_lea.sflag [#allocation9], %s544
        %s546 = sand.u32 %s149, 1
        %s547 = smul.addr %s546, 8
        %s548 = scalar_lea.vmem [#allocation8], %s547
        %s549 = sand.u32 %s32, 1
        %s550 = scalar_lea.sflag [#allocation9], %s549
        %s551 = sand.u32 %s177, 1
        %s552 = smul.addr %s551, 8
        %s553 = scalar_lea.vmem [#allocation10], %s552
        %s554 = sand.u32 %s205, 1
        %s555 = scalar_lea.sflag [#allocation12], %s554
        %s556 = sand.u32 %s205, 1
        %s557 = smul.addr %s556, 8
        %s558 = scalar_lea.vmem [#allocation11], %s557
        // Predicated region
        $region41: #{tpu_custom_call.1} parent=27 // pred_check
          %p559 = pneg %p131
        $region42: #{tpu_custom_call.1} parent=27 // pred_check_branch
          %561 = sbr.rel (%p559) target = $region44
        $region43: #{tpu_custom_call.1} parent=27 // pred_region
          %s563 = ssub.s32 128, 128
          %564 = vsyncadd %s540, %s563
          %s565 = smul.addr %s38, 2
          %s566 = smul.addr %s37, 2
          %s567 = sadd.s32 %s565, %s566
          %s568 = smul.addr %s567, 64
          %s569 = scalar_lea.hbm %s2, %s568
          %s571 = sshll.u32 %s543, 4
          %s572 = int_to_ptr.vmem [resolvable:$true] %s571
          %574 = dma.vmem_to_hbm [thread:$0]  %s572, 128, %s569, %s540
        $region44: #{tpu_custom_call.1} parent=27 // pred_fallthru
          _
        // Predicated region
        $region45: #{tpu_custom_call.1} parent=27 // pred_check
          %p575 = pneg %p159
        $region46: #{tpu_custom_call.1} parent=27 // pred_check_branch
          %577 = sbr.rel (%p575) target = $region48
        $region47: #{tpu_custom_call.1} parent=27 // pred_region
          %s579 = ssub.s32 128, 128
          %580 = vsyncadd %s545, %s579
          %s581 = smul.addr %s38, 2
          %s582 = smul.addr %s37, 2
          %s583 = sadd.s32 %s581, %s582
          %s584 = smul.addr %s583, 64
          %s585 = scalar_lea.hbm %s3, %s584
          %s587 = sshll.u32 %s548, 4
          %s588 = int_to_ptr.vmem [resolvable:$true] %s587
          %590 = dma.vmem_to_hbm [thread:$0]  %s588, 128, %s585, %s545
        $region48: #{tpu_custom_call.1} parent=27 // pred_fallthru
          _
        // Predicated region
        $region49: #{tpu_custom_call.1} parent=27 // pred_check
          %p591 = pneg %p187
        $region50: #{tpu_custom_call.1} parent=27 // pred_check_branch
          %593 = sbr.rel (%p591) target = $region52
        $region51: #{tpu_custom_call.1} parent=27 // pred_region
          %s595 = ssub.s32 128, 128
          %596 = vsyncadd %s550, %s595
          %s597 = smul.addr %s38, 2
          %s598 = smul.addr %s37, 2
          %s599 = sadd.s32 %s597, %s598
          %s600 = smul.addr %s599, 64
          %s601 = scalar_lea.hbm %s4, %s600
          %s603 = sshll.u32 %s553, 4
          %s604 = int_to_ptr.vmem [resolvable:$true] %s603
          %606 = dma.vmem_to_hbm [thread:$0]  %s604, 128, %s601, %s550
        $region52: #{tpu_custom_call.1} parent=27 // pred_fallthru
          _
        // Predicated region
        $region53: #{tpu_custom_call.1} parent=27 // pred_check
          %p607 = pneg %p215
        $region54: #{tpu_custom_call.1} parent=27 // pred_check_branch
          %609 = sbr.rel (%p607) target = $region56
        $region55: #{tpu_custom_call.1} parent=27 // pred_region
          %s611 = ssub.s32 128, 128
          %612 = vsyncadd %s555, %s611
          %s613 = smul.addr %s38, 2
          %s614 = smul.addr %s37, 2
          %s615 = sadd.s32 %s613, %s614
          %s616 = smul.addr %s615, 64
          %s617 = scalar_lea.hbm %s5, %s616
          %s619 = sshll.u32 %s558, 4
          %s620 = int_to_ptr.vmem [resolvable:$true] %s619
          %622 = dma.vmem_to_hbm [thread:$0]  %s620, 128, %s617, %s555
        $region56: #{tpu_custom_call.1} parent=27 // pred_fallthru
          _
      $region28: #{tpu_custom_call.1} parent=5 // pred_fallthru
        _
      %p623 = scmp.le.s32.totalorder 2, %s27
      // Predicated region
      $region57: #{tpu_custom_call.1} parent=5 // pred_check
        %p624 = pneg %p623
      $region58: #{tpu_custom_call.1} parent=5 // pred_check_branch
        %626 = sbr.rel (%p624) target = $region60
      $region59: #{tpu_custom_call.1} parent=5 // pred_region
        %s627 = ssub.s32 %s27, 2
        // Predicated region
        $region61: #{tpu_custom_call.1} parent=59 // pred_check
          %p628 = pneg %p137
        $region62: #{tpu_custom_call.1} parent=59 // pred_check_branch
          %630 = sbr.rel (%p628) target = $region64
        $region63: #{tpu_custom_call.1} parent=59 // pred_region
          %s631 = sand.u32 %s122, 1
          %s632 = scalar_lea.sflag [#allocation4], %s631
          %s633 = sand.u32 %s122, 1
          %s634 = smul.addr %s633, 8
          %s635 = scalar_lea.vmem [#allocation7], %s634
          %636 = dma.done %s632, 128
        $region64: #{tpu_custom_call.1} parent=59 // pred_fallthru
          _
        // Predicated region
        $region65: #{tpu_custom_call.1} parent=59 // pred_check
          %p637 = pneg %p165
        $region66: #{tpu_custom_call.1} parent=59 // pred_check_branch
          %639 = sbr.rel (%p637) target = $region68
        $region67: #{tpu_custom_call.1} parent=59 // pred_region
          %s640 = sand.u32 %s33, 1
          %s641 = scalar_lea.sflag [#allocation9], %s640
          %s642 = sand.u32 %s150, 1
          %s643 = smul.addr %s642, 8
          %s644 = scalar_lea.vmem [#allocation8], %s643
          %645 = dma.done %s641, 128
        $region68: #{tpu_custom_call.1} parent=59 // pred_fallthru
          _
        // Predicated region
        $region69: #{tpu_custom_call.1} parent=59 // pred_check
          %p646 = pneg %p193
        $region70: #{tpu_custom_call.1} parent=59 // pred_check_branch
          %648 = sbr.rel (%p646) target = $region72
        $region71: #{tpu_custom_call.1} parent=59 // pred_region
          %s649 = sand.u32 %s33, 1
          %s650 = scalar_lea.sflag [#allocation9], %s649
          %s651 = sand.u32 %s178, 1
          %s652 = smul.addr %s651, 8
          %s653 = scalar_lea.vmem [#allocation10], %s652
          %654 = dma.done %s650, 128
        $region72: #{tpu_custom_call.1} parent=59 // pred_fallthru
          _
        // Predicated region
        $region73: #{tpu_custom_call.1} parent=59 // pred_check
          %p655 = pneg %p221
        $region74: #{tpu_custom_call.1} parent=59 // pred_check_branch
          %657 = sbr.rel (%p655) target = $region76
        $region75: #{tpu_custom_call.1} parent=59 // pred_region
          %s658 = sand.u32 %s206, 1
          %s659 = scalar_lea.sflag [#allocation12], %s658
          %s660 = sand.u32 %s206, 1
          %s661 = smul.addr %s660, 8
          %s662 = scalar_lea.vmem [#allocation11], %s661
          %663 = dma.done %s659, 128
        $region76: #{tpu_custom_call.1} parent=59 // pred_fallthru
          _
      $region60: #{tpu_custom_call.1} parent=5 // pred_fallthru
        _
    $region6: #{tpu_custom_call.1} parent=1 // loop_footer
      %s31 = sadd.s32 1, %s27
    $region7: #{tpu_custom_call.1} parent=1 // loop_footer_branch
      %26 = sbr.rel target = $region3
    $region8: #{tpu_custom_call.1} parent=1 // loop_exit
      _
    %664 = vsyncpa [#allocation3], 1
    %s665 = scalar_lea.sflag [#allocation3], 1
    %666 = vsyncpa %s665, 1
    %667 = vsyncpa [#allocation6], 1
    %s668 = scalar_lea.sflag [#allocation6], 1
    %669 = vsyncpa %s668, 1
    %670 = vsyncpa [#allocation4], 1
    %s671 = scalar_lea.sflag [#allocation4], 1
    %672 = vsyncpa %s671, 1
    %673 = vsyncpa [#allocation9], 1
    %s674 = scalar_lea.sflag [#allocation9], 1
    %675 = vsyncpa %s674, 1
    %676 = vsyncpa [#allocation12], 1
    %s677 = scalar_lea.sflag [#allocation12], 1
    %678 = vsyncpa %s677, 1

</llo_original>
